<compile_context>
chip_gen: v5e
topology: v5e:2x2
jax: 0.10.0
libtpu: 0.0.40
codegen_flags: <defaults>
</compile_context>

<pallas_src>
import jax
import jax.numpy as jnp
import numpy as np
from jax.experimental import pallas as pl
from jax.experimental.pallas import tpu as pltpu


def _build_pe(d_model: int, height: int, width: int) -> jnp.ndarray:
    """Deterministic replica of the PyTorch __init__ buffer `pe` (float32)."""
    assert d_model % 4 == 0, "PositionalEncoding2D requires d_model % 4 == 0"
    pe = np.zeros((d_model, height, width), dtype=np.float32)
    y_pos = np.arange(height, dtype=np.float32)[:, None].repeat(width, axis=1)
    x_pos = np.arange(width, dtype=np.float32)[None, :].repeat(height, axis=0)
    for i in range(0, d_model, 4):
        div_term = 10000.0 ** (i / d_model)
        pe[i, :, :] = np.sin(y_pos / div_term)
        pe[i + 1, :, :] = np.cos(y_pos / div_term)
        pe[i + 2, :, :] = np.sin(x_pos / div_term)
        pe[i + 3, :, :] = np.cos(x_pos / div_term)
    return jnp.asarray(pe)


def _add_pe_tile_kernel(x_ref, pe_ref, o_ref):
    # All three refs are (C, T) tiles: pure 2-vld / 1-vadd / 1-vst, no broadcast.
    o_ref[...] = x_ref[...] + pe_ref[...]


def _add_pe_bcast_kernel(x_ref, pe_ref, o_ref):
    # x/o: (B_t, C, HW); pe: (C, HW). One broadcast per kernel invocation.
    o_ref[...] = x_ref[...] + pe_ref[...][None, :, :]


def _vmem_budget_and_limit():
    """Per-generation tile budget + vmem_limit_bytes.

    v5e/v6e (128 MiB VMEM): budget 48 MiB, limit 64 MiB.
    v7x (64 MiB / TC):      budget 32 MiB, limit 48 MiB.
    Falls back to the conservative v7x numbers if the query fails.
    """
    try:
        cap = int(getattr(pltpu.get_tpu_info(), "vmem_capacity_bytes"))
    except Exception:  # off-TPU tracing / older runtimes
        cap = 64 * 1024 * 1024
    budget = min(cap // 2, 48 * 1024 * 1024)
    limit = min(cap, budget + 16 * 1024 * 1024)
    return budget, limit


def _choose_hw_tile(C: int, HW: int, itemsize: int, budget: int) -> int:
    """Largest lane-dense tile of the flattened H*W axis under the budget.

    Per grid step footprint ~= 2*x_tile + 2*out_tile + 2*pe_tile
                             = 6 * C * T * itemsize   (double-buffered).
    If the whole axis fits, return HW (full-dim block, always legal).
    Otherwise return a multiple of 128; the last grid tile may be ragged
    (masked stores on that tile only) -- no divisor-of-HW requirement.
    """
    max_t = budget // (6 * C * itemsize)
    if HW <= max_t:
        return HW
    return max(128, (max_t // 128) * 128)


def positional_encoding_2d(x: jnp.ndarray, pe: jnp.ndarray,
                           *, vmem_budget_bytes: int | None = None
                           ) -> jnp.ndarray:
    """x: (B, C, H, W); pe: (C, H, W). Returns x + pe[None] (dtype of x)."""
    B, C, H, W = x.shape
    assert pe.shape == (C, H, W)
    HW = H * W
    itemsize = np.dtype(x.dtype).itemsize

    if vmem_budget_bytes is None:
        budget, vmem_limit = _vmem_budget_and_limit()
    else:
        budget = vmem_budget_bytes
        vmem_limit = vmem_budget_bytes + 16 * 1024 * 1024

    if pe.dtype != x.dtype:
        # NOTE: for bf16/fp8 activations this down-casts pe before the add
        # (slightly different from PyTorch's f32-promoting add); callers should
        # cache pe in the model dtype once rather than paying this convert
        # (full HBM read+write of pe) on every forward.
        pe = pe.astype(x.dtype)

    x_flat = x.reshape(B, C, HW)       # free reshape (row-major contiguous)
    pe_flat = pe.reshape(C, HW)

    # NOTE: for very small C with f32 (<8) or bf16 (<16) the (C, T) tiles pad
    # sublanes; folding H into the sublane dim would help, but it trades away
    # lane density unless W % 128 == 0, so it is not done generically here.
    T = _choose_hw_tile(C, HW, itemsize, budget)

    if T == HW:
        # Whole (C, HW) slab fits per step: block batches together and let the
        # kernel broadcast pe once per invocation. pe's block index is constant
        # -> it is DMA'd once (per TC shard on v7x). At small sizes this is a
        # single grid step (no per-step overhead beyond launch).
        per_batch = C * HW * itemsize
        bt_max = max(1, (budget // per_batch - 2) // 4)   # (4*B_t + 2)*C*HW <= budget
        if bt_max >= B:
            B_t = B
        else:
            B_t = max(d for d in range(1, bt_max + 1) if B % d == 0)
        n_b = B // B_t

        out_flat = pl.pallas_call(
            _add_pe_bcast_kernel,
            out_shape=jax.ShapeDtypeStruct((B, C, HW), x.dtype),
            grid=(n_b,),
            in_specs=[
                pl.BlockSpec((B_t, C, HW), lambda i: (i, 0, 0)),
                pl.BlockSpec((C, HW), lambda i: (0, 0)),   # constant -> fetched once
            ],
            out_specs=pl.BlockSpec((B_t, C, HW), lambda i: (i, 0, 0)),
            compiler_params=pltpu.CompilerParams(
                dimension_semantics=("parallel",),
                vmem_limit_bytes=vmem_limit,
            ),
        )(x_flat, pe_flat)
    else:
        # HW must be tiled. Batch is the innermost grid axis so pe's block
        # index is constant across the B inner steps (no re-fetch); the leading
        # HW-tile axis is the one sharded across TensorCores on v7x.
        n_t = pl.cdiv(HW, T)

        out_flat = pl.pallas_call(
            _add_pe_tile_kernel,
            out_shape=jax.ShapeDtypeStruct((B, C, HW), x.dtype),
            grid=(n_t, B),
            in_specs=[
                pl.BlockSpec((pl.Squeezed(), C, T), lambda t, b: (b, 0, t)),
                pl.BlockSpec((C, T), lambda t, b: (0, t)),  # constant across b
            ],
            out_specs=pl.BlockSpec((pl.Squeezed(), C, T), lambda t, b: (b, 0, t)),
            compiler_params=pltpu.CompilerParams(
                dimension_semantics=("parallel", "parallel"),
                vmem_limit_bytes=vmem_limit,
            ),
        )(x_flat, pe_flat)

    return out_flat.reshape(B, C, H, W)


if __name__ == "__main__":
    B, d_model, H, W = 2, 8, 16, 16

    key = jax.random.PRNGKey(0)
    x = jax.random.normal(key, (B, d_model, H, W), dtype=jnp.float32)

    pe = _build_pe(d_model, H, W)

    out = positional_encoding_2d(x, pe)
    out = jax.block_until_ready(out)

    # Reference check (plain numpy semantics of the PyTorch forward).
    ref = np.asarray(x) + np.asarray(pe)[None, ...]
    np.testing.assert_allclose(np.asarray(out), ref, rtol=1e-6, atol=1e-6)

    print("KERNEL_OK")
</pallas_src>

<mosaic_0001>
module attributes {stable_mosaic.version = 11 : i64} {
  func.func @_add_pe_bcast_kernel(%arg0: i32, %arg1: memref<2x8x256xf32, #tpu.memory_space<vmem>>, %arg2: memref<8x256xf32, #tpu.memory_space<vmem>>, %arg3: memref<2x8x256xf32, #tpu.memory_space<vmem>>) attributes {dimension_semantics = [#tpu.dimension_semantics<parallel>], iteration_bounds = array<i64: 1>, scalar_prefetch = 0 : i64, scratch_operands = 0 : i64, tpu.core_type = #tpu.core_type<tc>, window_params = [{transform_indices = @transform_0, window_bounds = array<i64: 2, 8, 256>}, {pipeline_mode = #tpu.pipeline_mode<synchronous>, transform_indices = @transform_1, window_bounds = array<i64: 8, 256>}, {transform_indices = @transform_2, window_bounds = array<i64: 2, 8, 256>}]} {
    %c0 = arith.constant 0 : index
    %c0_0 = arith.constant 0 : index
    %c0_1 = arith.constant 0 : index
    %0 = vector.load %arg1[%c0, %c0_0, %c0_1] : memref<2x8x256xf32, #tpu.memory_space<vmem>>, vector<2x8x256xf32>
    %c0_2 = arith.constant 0 : index
    %c0_3 = arith.constant 0 : index
    %1 = vector.load %arg2[%c0_2, %c0_3] : memref<8x256xf32, #tpu.memory_space<vmem>>, vector<8x256xf32>
    %2 = vector.shape_cast %1 : vector<8x256xf32> to vector<1x8x256xf32>
    %3 = vector.broadcast %2 : vector<1x8x256xf32> to vector<2x8x256xf32>
    %4 = arith.addf %0, %3 : vector<2x8x256xf32>
    %c0_4 = arith.constant 0 : index
    %c0_5 = arith.constant 0 : index
    %c0_6 = arith.constant 0 : index
    %5 = vector.load %arg3[%c0_4, %c0_5, %c0_6] : memref<2x8x256xf32, #tpu.memory_space<vmem>>, vector<2x8x256xf32>
    tpu.vector_store %arg3[%c0_4, %c0_5, %c0_6], %4 {strides = array<i32>} : memref<2x8x256xf32, #tpu.memory_space<vmem>>, vector<2x8x256xf32>,
    return
  }
  func.func @transform_0(%arg0: i32) -> (i32, i32, i32) {
    %c0_i32 = arith.constant 0 : i32
    %c0_i32_0 = arith.constant 0 : i32
    %c0_i32_1 = arith.constant 0 : i32
    return %arg0, %c0_i32, %c0_i32_0 : i32, i32, i32
  }
  func.func @transform_1(%arg0: i32) -> (i32, i32) {
    %c0_i32 = arith.constant 0 : i32
    %c0_i32_0 = arith.constant 0 : i32
    %c0_i32_1 = arith.constant 0 : i32
    return %c0_i32, %c0_i32_0 : i32, i32
  }
  func.func @transform_2(%arg0: i32) -> (i32, i32, i32) {
    %c0_i32 = arith.constant 0 : i32
    %c0_i32_0 = arith.constant 0 : i32
    %c0_i32_1 = arith.constant 0 : i32
    return %arg0, %c0_i32, %c0_i32_0 : i32, i32, i32
  }
}

</mosaic_0001>

<llo_original>
// kernel: tpu_custom_call.1
$region0: #{tpu_custom_call.1}
  #allocation0 [shape = 'u32[]', space=smem, size = 0x4, offset = 0x4, fixed_abs, tag = 'smem constant byte address 0x4 - core index']
  #allocation1 [shape = 'u32[72,128]{1,0:T(1,128)}', space=vmem, size = 0x9000, scoped, tag = 'internal scratch']
  %s0 = inlined_call_operand.hbm [shape: f32[2,8,256], index: 0, kind: input, shape index: {}]
  %s1 = inlined_call_operand.hbm [shape: f32[8,256], index: 1, kind: input, shape index: {}]
  %s2 = inlined_call_operand.hbm [shape: f32[2,8,256], index: 2, kind: output, shape index: {}]
  %s3 = sld [smem:[#allocation0]]
  $region26: #{tpu_custom_call.1} parent=0
    _
  %s5 = ssub.s32 1, %s3
  %s6 = scalar_select 0, %s5, %s3
  $region1: #{tpu_custom_call.1} parent=0
    #allocation2 [shape = 'u8[16384]{0}', space=vmem, size = 0x4000, scoped, tag = 'input window, operand 0, single buffered']
    #allocation3 [shape = 's32[1]{0}', space=sflag, size = 0x4, scoped, tag = 'scoped memory for tpu_custom_call.1']
    #allocation4 [shape = 's32[1]{0}', space=sflag, size = 0x4, scoped, tag = 'scoped memory for tpu_custom_call.1']
    #allocation5 [shape = 'u8[8192]{0}', space=vmem, size = 0x2000, scoped, tag = 'input window, operand 1, single buffered']
    #allocation6 [shape = 's32[1]{0}', space=sflag, size = 0x4, scoped, tag = 'scoped memory for tpu_custom_call.1']
    #allocation7 [shape = 'u8[16384]{0}', space=vmem, size = 0x4000, scoped, tag = 'output window, operand 0, single buffered']
    %7 = vsyncpa [#allocation3], 0
    %8 = vsyncpa [#allocation6], 0
    %9 = vsyncpa [#allocation4], 0
    // Predicated region
    $region2: #{tpu_custom_call.1} parent=1 // pred_check
      _
    $region3: #{tpu_custom_call.1} parent=1 // pred_check_branch
      %11 = sbr.rel (0) target = $region5
    $region4: #{tpu_custom_call.1} parent=1 // pred_region
      %13 = vsyncadd [#allocation3], 0
      %s14 = sshll.u32 %s0, 4
      %s15 = int_to_ptr.hbm [resolvable:$true] %s14
      %s16 = sshll.u32 [#allocation2], 4
      %s17 = int_to_ptr.vmem [resolvable:$true] %s16
      %22 = dma.hbm_to_vmem [thread:$0]  %s15, 512, %s17, [#allocation3], 256, 256, 16
    $region5: #{tpu_custom_call.1} parent=1 // pred_fallthru
      _
    // Predicated region
    $region6: #{tpu_custom_call.1} parent=1 // pred_check
      _
    $region7: #{tpu_custom_call.1} parent=1 // pred_check_branch
      %24 = sbr.rel (0) target = $region9
    $region8: #{tpu_custom_call.1} parent=1 // pred_region
      %26 = vsyncadd [#allocation6], 0
      %s28 = sshll.u32 %s1, 4
      %s29 = int_to_ptr.hbm [resolvable:$true] %s28
      %s30 = sshll.u32 [#allocation5], 4
      %s31 = int_to_ptr.vmem [resolvable:$true] %s30
      %33 = dma.hbm_to_vmem [thread:$0]  %s29, 256, %s31, [#allocation6]
    $region9: #{tpu_custom_call.1} parent=1 // pred_fallthru
      _
    // Predicated region
    $region10: #{tpu_custom_call.1} parent=1 // pred_check
      _
    $region11: #{tpu_custom_call.1} parent=1 // pred_check_branch
      %35 = sbr.rel (0) target = $region13
    $region12: #{tpu_custom_call.1} parent=1 // pred_region
      %37 = dma.done [#allocation3], 512
    $region13: #{tpu_custom_call.1} parent=1 // pred_fallthru
      _
    // Predicated region
    $region14: #{tpu_custom_call.1} parent=1 // pred_check
      _
    $region15: #{tpu_custom_call.1} parent=1 // pred_check_branch
      %39 = sbr.rel (0) target = $region17
    $region16: #{tpu_custom_call.1} parent=1 // pred_region
      %41 = dma.done [#allocation6], 256
    $region17: #{tpu_custom_call.1} parent=1 // pred_fallthru
      _
    %v42 = vld [vmem:[#allocation2] sm:$0xff]
    %v43 = vld [vmem:[#allocation2 + $0x8] sm:$0xff]
    %v44 = vld [vmem:[#allocation2 + $0x10] sm:$0xff]
    %v45 = vld [vmem:[#allocation2 + $0x18] sm:$0xff]
    %v46 = vld [vmem:[#allocation5] sm:$0xff]
    %v47 = vld [vmem:[#allocation5 + $0x8] sm:$0xff]
    %v48 = vadd.f32 %v42, %v46
    %v49 = vadd.f32 %v43, %v47
    %v50 = vadd.f32 %v44, %v46
    %v51 = vadd.f32 %v45, %v47
    %52 = vst [vmem:[#allocation7] sm:$0xff] %v48
    %53 = vst [vmem:[#allocation7 + $0x8] sm:$0xff] %v49
    %54 = vst [vmem:[#allocation7 + $0x10] sm:$0xff] %v50
    %55 = vst [vmem:[#allocation7 + $0x18] sm:$0xff] %v51
    // Predicated region
    $region18: #{tpu_custom_call.1} parent=1 // pred_check
      _
    $region19: #{tpu_custom_call.1} parent=1 // pred_check_branch
      %57 = sbr.rel (0) target = $region21
    $region20: #{tpu_custom_call.1} parent=1 // pred_region
      %59 = vsyncadd [#allocation4], 0
      %s60 = sshll.u32 [#allocation7], 4
      %s61 = int_to_ptr.vmem [resolvable:$true] %s60
      %s62 = sshll.u32 %s2, 4
      %s63 = int_to_ptr.hbm [resolvable:$true] %s62
      %68 = dma.vmem_to_hbm [thread:$0]  %s61, 512, %s63, [#allocation4], 256, 256, 16
    $region21: #{tpu_custom_call.1} parent=1 // pred_fallthru
      _
    // Predicated region
    $region22: #{tpu_custom_call.1} parent=1 // pred_check
      _
    $region23: #{tpu_custom_call.1} parent=1 // pred_check_branch
      %70 = sbr.rel (0) target = $region25
    $region24: #{tpu_custom_call.1} parent=1 // pred_region
      %72 = dma.done [#allocation4], 512
    $region25: #{tpu_custom_call.1} parent=1 // pred_fallthru
      _
    %73 = vsyncpa [#allocation3], 1
    %74 = vsyncpa [#allocation6], 1
    %75 = vsyncpa [#allocation4], 1

</llo_original>
